<compile_context>
chip_gen: v6e
topology: v6e:2x2x1
jax: 0.10.0
libtpu: 0.0.40
codegen_flags: <defaults>
</compile_context>

<pallas_src>
import functools

import jax
import jax.numpy as jnp
from jax.experimental import pallas as pl
from jax.experimental.pallas import tpu as pltpu


def _log_sigmoid(x):
    # numerically-stable logsigmoid(x) = min(x, 0) - log1p(exp(-|x|))
    return jnp.minimum(x, 0.0) - jnp.log1p(jnp.exp(-jnp.abs(x)))


def _neg_loss_kernel(b_ref, tgt_ref, ctx_ref, neg_ref, hid_ref, wout_ref,
                     partial_ref, *, tile_b, compute_dtype, fuse_output_gathers):
    # b_ref   : (1,)    i32 SMEM  real (unpadded) batch size (scalar prefetch)
    # tgt_ref : (TB, 1) i32       target indices for this batch tile
    # ctx_ref : (TB, 1) i32       context indices
    # neg_ref : (TB, K) i32       negative-sample indices
    # hid_ref : (V, D)  f32       embed_hidden.weight
    # wout_ref: (V, D)  f32       embed_output.weight
    # partial_ref: (8, 128) f32   per-tile partial sum of logsigmoid terms
    V = hid_ref.shape[0]
    TB = tgt_ref.shape[0]
    K = neg_ref.shape[1]

    iota_v = jax.lax.broadcasted_iota(jnp.int32, (1, V), 1)              # (1, V)

    # One-hot gathers built in f32 (VPU-native on v5e too); cast at the dot only.
    tgt_oh = (tgt_ref[...] == iota_v).astype(jnp.float32)                # (TB, V)
    ctx_oh = (ctx_ref[...] == iota_v).astype(jnp.float32)                # (TB, V)

    # Pre-sum the negative one-hots over K: the loss only needs
    #   sum_k <n_bk, t_b> = <(sum_k onehot(neg_bk)) @ W_out, t_b>
    # (K x fewer MXU rows; duplicates handled exactly as counts).
    neg_counts = jnp.zeros((TB, V), jnp.float32)
    for k in range(K):                                                   # K tiny & static
        neg_counts = neg_counts + (neg_ref[:, k:k + 1] == iota_v).astype(jnp.float32)

    w_hid = hid_ref[...].astype(compute_dtype)
    w_out = wout_ref[...].astype(compute_dtype)

    # t = embed_hidden[targets]
    t = jnp.dot(tgt_oh.astype(compute_dtype), w_hid,
                preferred_element_type=jnp.float32)                      # (TB, D)

    if fuse_output_gathers:
        # One fused MXU call against embed_output for both gathers:
        #   rows [0:TB]   -> context embeddings c_b
        #   rows [TB:2TB] -> sum_k embed_output[neg_bk]
        fused_oh = jnp.concatenate([ctx_oh, neg_counts],
                                   axis=0).astype(compute_dtype)         # (2TB, V)
        fused_emb = jnp.dot(fused_oh, w_out,
                            preferred_element_type=jnp.float32)          # (2TB, D)
        c = fused_emb[:TB]                                               # static slices,
        nsum = fused_emb[TB:]                                            # sublane-aligned
    else:
        # Two TB-row dots (no sublane concat): preferred on v5e's 128x128 MXU.
        c = jnp.dot(ctx_oh.astype(compute_dtype), w_out,
                    preferred_element_type=jnp.float32)                  # (TB, D)
        nsum = jnp.dot(neg_counts.astype(compute_dtype), w_out,
                       preferred_element_type=jnp.float32)               # (TB, D)

    s_pos = jnp.sum(t * c, axis=1, keepdims=True)                        # (TB, 1)
    s_neg = jnp.sum(t * nsum, axis=1, keepdims=True)                     # (TB, 1)

    # Validity mask generated in-kernel (no extra input DMA stream).
    row = (pl.program_id(0) * tile_b
           + jax.lax.broadcasted_iota(jnp.int32, (TB, 1), 0))
    mask = (row < b_ref[0]).astype(jnp.float32)                          # (TB, 1)

    partial = jnp.sum((_log_sigmoid(s_pos) + _log_sigmoid(-s_neg)) * mask)

    # Lane-dense (8, 128) output block (unmasked stores); wrapper reads [0, 0].
    partial_ref[...] = jnp.full((8, 128), partial, dtype=jnp.float32)


def skipgram_neg_loss(targets, contexts, neg_samples, w_hidden, w_output,
                      *, tile_b=128, use_bf16_matmul=False,
                      fuse_output_gathers=True):
    """Batch-mean NEG loss (SkipGramModel.forward) via a Pallas TPU kernel."""
    B = targets.shape[0]
    K = neg_samples.shape[1]
    V, D = w_hidden.shape

    # Batch tile: multiple of 8 sublanes, no larger than the (8-padded) batch.
    # Default tile_b=128 -> a single grid step for small batches (v5e/v6e: the
    # grid is a serial loop, so fewer steps is strictly better); bigger batches
    # give multiple "parallel" tiles for v7x's two TensorCores.
    b_pad8 = -(-B // 8) * 8
    tile_b = max(8, min((int(tile_b) // 8) * 8, b_pad8))
    num_tiles = pl.cdiv(B, tile_b)
    b_pad = num_tiles * tile_b
    pad = b_pad - B

    tgt2 = targets.astype(jnp.int32).reshape(B, 1)
    ctx2 = contexts.astype(jnp.int32).reshape(B, 1)
    neg2 = neg_samples.astype(jnp.int32)
    if pad:
        tgt2 = jnp.pad(tgt2, ((0, pad), (0, 0)))
        ctx2 = jnp.pad(ctx2, ((0, pad), (0, 0)))
        neg2 = jnp.pad(neg2, ((0, pad), (0, 0)))
    b_scalar = jnp.array([B], jnp.int32)   # scalar-prefetched real batch size

    # bf16 operands hit the native bf16 MXU path; the one-hots/counts are exact
    # in bf16 but the tables lose ~3 decimal digits, so default stays f32.
    compute_dtype = jnp.bfloat16 if use_bf16_matmul else jnp.float32
    kernel = functools.partial(_neg_loss_kernel, tile_b=tile_b,
                               compute_dtype=compute_dtype,
                               fuse_output_gathers=fuse_output_gathers)

    # VMEM budget: single-buffered tables + double-buffered index tiles +
    # one-hot / embedding intermediates + output blocks, with 4x headroom.
    tbl_bytes = 2 * V * D * 4
    idx_bytes = 2 * 2 * tile_b * (2 + K) * 4
    inter_bytes = (5 * tile_b * V + 4 * tile_b * D) * 4
    out_bytes = 2 * 8 * 128 * 4
    vmem_limit = int(min(max(4 * (tbl_bytes + idx_bytes + inter_bytes + out_bytes),
                             16 << 20), 64 << 20))

    def _const_table_spec():
        # Block index never changes -> single buffer (no pointless double-buffer).
        return pl.BlockSpec((V, D), lambda i, b: (0, 0),
                            pipeline_mode=pl.Buffered(1))

    grid_spec = pltpu.PrefetchScalarGridSpec(
        num_scalar_prefetch=1,
        grid=(num_tiles,),
        in_specs=[
            pl.BlockSpec((tile_b, 1), lambda i, b: (i, 0)),   # targets
            pl.BlockSpec((tile_b, 1), lambda i, b: (i, 0)),   # contexts
            pl.BlockSpec((tile_b, K), lambda i, b: (i, 0)),   # negative samples
            _const_table_spec(),                              # embed_hidden.weight
            _const_table_spec(),                              # embed_output.weight
        ],
        out_specs=pl.BlockSpec((8, 128), lambda i, b: (i, 0)),
    )

    partials = pl.pallas_call(
        kernel,
        out_shape=jax.ShapeDtypeStruct((num_tiles * 8, 128), jnp.float32),
        grid_spec=grid_spec,
        compiler_params=pltpu.CompilerParams(
            dimension_semantics=("parallel",),   # v7x: both TCs split the batch
            vmem_limit_bytes=vmem_limit),
    )(b_scalar, tgt2, ctx2, neg2, w_hidden, w_output)

    if num_tiles == 1:
        total = partials[0, 0]
    else:
        total = jnp.sum(partials.reshape(num_tiles, 8, 128)[:, 0, 0])
    return -total / jnp.float32(B)


def _reference_loss(targets, contexts, neg_samples, w_hidden, w_output):
    # pure-JAX mirror of the PyTorch forward, for verification
    t = w_hidden[targets]                       # (B, D)
    c = w_output[contexts]                      # (B, D)
    pos = jnp.sum(jax.nn.log_sigmoid(jnp.sum(t * c, axis=1)))
    n = w_output[neg_samples]                   # (B, K, D)
    score = jnp.einsum("bkd,bd->bk", n, t)
    neg = jnp.sum(jax.nn.log_sigmoid(-jnp.sum(score, axis=1)))
    return -(pos + neg) / targets.shape[0]


if __name__ == "__main__":
    V = 64      # vocab_chars_size (character vocabulary -> small)
    D = 32      # embed_dim
    B = 64      # batch size (num pairs)
    K = 5       # num negative samples

    key = jax.random.PRNGKey(0)
    k_hid, k_out, k_tgt, k_ctx, k_neg = jax.random.split(key, 5)

    init_range = 0.5 / D
    # embed_hidden.weight ~ U(-0.5/D, 0.5/D), as in the module's __init_embed.
    w_hidden = jax.random.uniform(k_hid, (V, D), jnp.float32, -init_range, init_range)
    # Note: the module zero-inits embed_output; use a small deterministic uniform
    # here so the synthetic test exercises non-trivial compute paths.
    w_output = jax.random.uniform(k_out, (V, D), jnp.float32, -init_range, init_range)

    targets = jax.random.randint(k_tgt, (B,), 0, V, jnp.int32)
    contexts = jax.random.randint(k_ctx, (B,), 0, V, jnp.int32)
    neg_samples = jax.random.randint(k_neg, (B, K), 0, V, jnp.int32)

    ref = _reference_loss(targets, contexts, neg_samples, w_hidden, w_output)

    # 1) Default config: whole batch in one grid step (fused output gathers).
    loss = skipgram_neg_loss(targets, contexts, neg_samples, w_hidden, w_output)
    loss = jax.block_until_ready(loss)
    assert jnp.allclose(loss, ref, rtol=1e-5, atol=1e-5), (loss, ref)

    # 2) Multi-tile "parallel" grid path (tile_b=32 -> 2 batch tiles).
    loss2 = skipgram_neg_loss(targets, contexts, neg_samples, w_hidden, w_output,
                              tile_b=32)
    loss2 = jax.block_until_ready(loss2)
    assert jnp.allclose(loss2, ref, rtol=1e-5, atol=1e-5), (loss2, ref)

    # 3) Split output gathers (two TB-row dots; preferred layout on v5e).
    loss3 = skipgram_neg_loss(targets, contexts, neg_samples, w_hidden, w_output,
                              fuse_output_gathers=False)
    loss3 = jax.block_until_ready(loss3)
    assert jnp.allclose(loss3, ref, rtol=1e-5, atol=1e-5), (loss3, ref)

    print("KERNEL_OK")
</pallas_src>

<mosaic_0001>
module attributes {stable_mosaic.version = 11 : i64} {
  func.func @_neg_loss_kernel(%arg0: i32, %arg1: memref<1xi32, #tpu.memory_space<smem>>, %arg2: memref<64x1xi32, #tpu.memory_space<vmem>>, %arg3: memref<64x1xi32, #tpu.memory_space<vmem>>, %arg4: memref<64x5xi32, #tpu.memory_space<vmem>>, %arg5: memref<64x32xf32, #tpu.memory_space<vmem>>, %arg6: memref<64x32xf32, #tpu.memory_space<vmem>>, %arg7: memref<8x128xf32, #tpu.memory_space<vmem>>) attributes {dimension_semantics = [#tpu.dimension_semantics<parallel>], iteration_bounds = array<i64: 1>, scalar_prefetch = 1 : i64, scratch_operands = 0 : i64, tpu.core_type = #tpu.core_type<tc>, window_params = [{transform_indices = @transform_0, window_bounds = array<i64: 64, 1>}, {transform_indices = @transform_1, window_bounds = array<i64: 64, 1>}, {transform_indices = @transform_2, window_bounds = array<i64: 64, 5>}, {pipeline_mode = #tpu.pipeline_mode<synchronous>, transform_indices = @transform_3, window_bounds = array<i64: 64, 32>}, {pipeline_mode = #tpu.pipeline_mode<synchronous>, transform_indices = @transform_4, window_bounds = array<i64: 64, 32>}, {transform_indices = @transform_5, window_bounds = array<i64: 8, 128>}]} {
    %0 = tpu.iota {dimensions = array<i32: 1>} : vector<1x64xi32>
    %c0 = arith.constant 0 : index
    %c0_0 = arith.constant 0 : index
    %1 = vector.load %arg2[%c0, %c0_0] : memref<64x1xi32, #tpu.memory_space<vmem>>, vector<64x1xi32>
    %2 = vector.broadcast %1 : vector<64x1xi32> to vector<64x64xi32>
    %3 = vector.broadcast %0 : vector<1x64xi32> to vector<64x64xi32>
    %4 = arith.cmpi eq, %2, %3 : vector<64x64xi32>
    %5 = arith.extui %4 : vector<64x64xi1> to vector<64x64xi32>
    %6 = arith.sitofp %5 : vector<64x64xi32> to vector<64x64xf32>
    %c0_1 = arith.constant 0 : index
    %c0_2 = arith.constant 0 : index
    %7 = vector.load %arg3[%c0_1, %c0_2] : memref<64x1xi32, #tpu.memory_space<vmem>>, vector<64x1xi32>
    %8 = vector.broadcast %7 : vector<64x1xi32> to vector<64x64xi32>
    %9 = vector.broadcast %0 : vector<1x64xi32> to vector<64x64xi32>
    %10 = arith.cmpi eq, %8, %9 : vector<64x64xi32>
    %11 = arith.extui %10 : vector<64x64xi1> to vector<64x64xi32>
    %12 = arith.sitofp %11 : vector<64x64xi32> to vector<64x64xf32>
    %cst = arith.constant 0.000000e+00 : f32
    %13 = vector.broadcast %cst : f32 to vector<64x64xf32>
    %c0_3 = arith.constant 0 : index
    %c0_4 = arith.constant 0 : index
    %14 = vector.load %arg4[%c0_3, %c0_4] : memref<64x5xi32, #tpu.memory_space<vmem>>, vector<64x1xi32>
    %15 = vector.broadcast %14 : vector<64x1xi32> to vector<64x64xi32>
    %16 = vector.broadcast %0 : vector<1x64xi32> to vector<64x64xi32>
    %17 = arith.cmpi eq, %15, %16 : vector<64x64xi32>
    %18 = arith.extui %17 : vector<64x64xi1> to vector<64x64xi32>
    %19 = arith.sitofp %18 : vector<64x64xi32> to vector<64x64xf32>
    %20 = arith.addf %13, %19 : vector<64x64xf32>
    %c0_5 = arith.constant 0 : index
    %c1 = arith.constant 1 : index
    %21 = vector.load %arg4[%c0_5, %c1] : memref<64x5xi32, #tpu.memory_space<vmem>>, vector<64x1xi32>
    %22 = vector.broadcast %21 : vector<64x1xi32> to vector<64x64xi32>
    %23 = vector.broadcast %0 : vector<1x64xi32> to vector<64x64xi32>
    %24 = arith.cmpi eq, %22, %23 : vector<64x64xi32>
    %25 = arith.extui %24 : vector<64x64xi1> to vector<64x64xi32>
    %26 = arith.sitofp %25 : vector<64x64xi32> to vector<64x64xf32>
    %27 = arith.addf %20, %26 : vector<64x64xf32>
    %c0_6 = arith.constant 0 : index
    %c2 = arith.constant 2 : index
    %28 = vector.load %arg4[%c0_6, %c2] : memref<64x5xi32, #tpu.memory_space<vmem>>, vector<64x1xi32>
    %29 = vector.broadcast %28 : vector<64x1xi32> to vector<64x64xi32>
    %30 = vector.broadcast %0 : vector<1x64xi32> to vector<64x64xi32>
    %31 = arith.cmpi eq, %29, %30 : vector<64x64xi32>
    %32 = arith.extui %31 : vector<64x64xi1> to vector<64x64xi32>
    %33 = arith.sitofp %32 : vector<64x64xi32> to vector<64x64xf32>
    %34 = arith.addf %27, %33 : vector<64x64xf32>
    %c0_7 = arith.constant 0 : index
    %c3 = arith.constant 3 : index
    %35 = vector.load %arg4[%c0_7, %c3] : memref<64x5xi32, #tpu.memory_space<vmem>>, vector<64x1xi32>
    %36 = vector.broadcast %35 : vector<64x1xi32> to vector<64x64xi32>
    %37 = vector.broadcast %0 : vector<1x64xi32> to vector<64x64xi32>
    %38 = arith.cmpi eq, %36, %37 : vector<64x64xi32>
    %39 = arith.extui %38 : vector<64x64xi1> to vector<64x64xi32>
    %40 = arith.sitofp %39 : vector<64x64xi32> to vector<64x64xf32>
    %41 = arith.addf %34, %40 : vector<64x64xf32>
    %c0_8 = arith.constant 0 : index
    %c4 = arith.constant 4 : index
    %42 = vector.load %arg4[%c0_8, %c4] : memref<64x5xi32, #tpu.memory_space<vmem>>, vector<64x1xi32>
    %43 = vector.broadcast %42 : vector<64x1xi32> to vector<64x64xi32>
    %44 = vector.broadcast %0 : vector<1x64xi32> to vector<64x64xi32>
    %45 = arith.cmpi eq, %43, %44 : vector<64x64xi32>
    %46 = arith.extui %45 : vector<64x64xi1> to vector<64x64xi32>
    %47 = arith.sitofp %46 : vector<64x64xi32> to vector<64x64xf32>
    %48 = arith.addf %41, %47 : vector<64x64xf32>
    %c0_9 = arith.constant 0 : index
    %c0_10 = arith.constant 0 : index
    %49 = vector.load %arg5[%c0_9, %c0_10] : memref<64x32xf32, #tpu.memory_space<vmem>>, vector<64x32xf32>
    %c0_11 = arith.constant 0 : index
    %c0_12 = arith.constant 0 : index
    %50 = vector.load %arg6[%c0_11, %c0_12] : memref<64x32xf32, #tpu.memory_space<vmem>>, vector<64x32xf32>
    %cst_13 = arith.constant dense<0.000000e+00> : vector<64x32xf32>
    %51 = tpu.matmul %6, %49, %cst_13 {dimension_numbers = #tpu.dot_dimension_numbers<[1], [0], [0], [1], [0, 0, 1, 1], [], []>} : vector<64x64xf32>, vector<64x32xf32>, vector<64x32xf32> -> vector<64x32xf32>
    %52 = tpu.concatenate %12, %48 in 0 : vector<64x64xf32>, vector<64x64xf32> -> vector<128x64xf32>
    %cst_14 = arith.constant dense<0.000000e+00> : vector<128x32xf32>
    %53 = tpu.matmul %52, %50, %cst_14 {dimension_numbers = #tpu.dot_dimension_numbers<[1], [0], [0], [1], [0, 0, 1, 1], [], []>} : vector<128x64xf32>, vector<64x32xf32>, vector<128x32xf32> -> vector<128x32xf32>
    %54 = vector.extract_strided_slice %53 {offsets = [0, 0], sizes = [64, 32], strides = [1, 1]} : vector<128x32xf32> to vector<64x32xf32>
    %55 = vector.extract_strided_slice %53 {offsets = [64, 0], sizes = [64, 32], strides = [1, 1]} : vector<128x32xf32> to vector<64x32xf32>
    %56 = arith.mulf %51, %54 : vector<64x32xf32>
    %cst_15 = arith.constant dense<0.000000e+00> : vector<64xf32>
    %57 = vector.multi_reduction <add>, %56, %cst_15 [1] : vector<64x32xf32> to vector<64xf32>
    %58 = vector.shape_cast %57 : vector<64xf32> to vector<64x1xf32>
    %59 = arith.mulf %51, %55 : vector<64x32xf32>
    %cst_16 = arith.constant dense<0.000000e+00> : vector<64xf32>
    %60 = vector.multi_reduction <add>, %59, %cst_16 [1] : vector<64x32xf32> to vector<64xf32>
    %61 = vector.shape_cast %60 : vector<64xf32> to vector<64x1xf32>
    %c64_i32 = arith.constant 64 : i32
    %62 = arith.muli %arg0, %c64_i32 : i32
    %63 = tpu.iota {dimensions = array<i32: 0>} : vector<64x1xi32>
    %64 = vector.broadcast %62 : i32 to vector<64x1xi32>
    %65 = arith.addi %64, %63 : vector<64x1xi32>
    %c0_17 = arith.constant 0 : index
    %66 = memref.load %arg1[%c0_17] : memref<1xi32, #tpu.memory_space<smem>>
    %67 = vector.broadcast %66 : i32 to vector<64x1xi32>
    %68 = arith.cmpi slt, %65, %67 : vector<64x1xi32>
    %69 = arith.extui %68 : vector<64x1xi1> to vector<64x1xi32>
    %70 = arith.sitofp %69 : vector<64x1xi32> to vector<64x1xf32>
    %cst_18 = arith.constant 0.000000e+00 : f32
    %71 = vector.broadcast %cst_18 : f32 to vector<64x1xf32>
    %72 = arith.minimumf %58, %71 : vector<64x1xf32>
    %73 = math.absf %58 : vector<64x1xf32>
    %cst_19 = arith.constant 0.000000e+00 : f32
    %74 = vector.broadcast %cst_19 : f32 to vector<64x1xf32>
    %75 = arith.subf %74, %73 : vector<64x1xf32>
    %76 = math.exp %75 : vector<64x1xf32>
    %77 = math.log1p %76 : vector<64x1xf32>
    %78 = arith.subf %72, %77 : vector<64x1xf32>
    %cst_20 = arith.constant 0.000000e+00 : f32
    %79 = vector.broadcast %cst_20 : f32 to vector<64x1xf32>
    %80 = arith.subf %79, %61 : vector<64x1xf32>
    %cst_21 = arith.constant 0.000000e+00 : f32
    %81 = vector.broadcast %cst_21 : f32 to vector<64x1xf32>
    %82 = arith.minimumf %80, %81 : vector<64x1xf32>
    %83 = math.absf %80 : vector<64x1xf32>
    %cst_22 = arith.constant 0.000000e+00 : f32
    %84 = vector.broadcast %cst_22 : f32 to vector<64x1xf32>
    %85 = arith.subf %84, %83 : vector<64x1xf32>
    %86 = math.exp %85 : vector<64x1xf32>
    %87 = math.log1p %86 : vector<64x1xf32>
    %88 = arith.subf %82, %87 : vector<64x1xf32>
    %89 = arith.addf %78, %88 : vector<64x1xf32>
    %90 = arith.mulf %89, %70 : vector<64x1xf32>
    %91 = vector.shape_cast %90 : vector<64x1xf32> to vector<1x64x1xf32>
    %cst_23 = arith.constant dense<0.000000e+00> : vector<1xf32>
    %92 = vector.multi_reduction <add>, %91, %cst_23 [1, 2] : vector<1x64x1xf32> to vector<1xf32>
    %93 = vector.shape_cast %92 : vector<1xf32> to vector<1x1x1xf32>
    %94 = vector.extract %93[0, 0, 0] : f32 from vector<1x1x1xf32>
    %95 = vector.broadcast %94 : f32 to vector<8x128xf32>
    %c0_24 = arith.constant 0 : index
    %c0_25 = arith.constant 0 : index
    %96 = vector.load %arg7[%c0_24, %c0_25] : memref<8x128xf32, #tpu.memory_space<vmem>>, vector<8x128xf32>
    tpu.vector_store %arg7[%c0_24, %c0_25], %95 {strides = array<i32>} : memref<8x128xf32, #tpu.memory_space<vmem>>, vector<8x128xf32>,
    return
  }
  func.func @transform_0(%arg0: i32, %arg1: memref<1xi32, #tpu.memory_space<smem>>) -> (i32, i32) {
    %c0_i32 = arith.constant 0 : i32
    %c0_i32_0 = arith.constant 0 : i32
    return %arg0, %c0_i32 : i32, i32
  }
  func.func @transform_1(%arg0: i32, %arg1: memref<1xi32, #tpu.memory_space<smem>>) -> (i32, i32) {
    %c0_i32 = arith.constant 0 : i32
    %c0_i32_0 = arith.constant 0 : i32
    return %arg0, %c0_i32 : i32, i32
  }
  func.func @transform_2(%arg0: i32, %arg1: memref<1xi32, #tpu.memory_space<smem>>) -> (i32, i32) {
    %c0_i32 = arith.constant 0 : i32
    %c0_i32_0 = arith.constant 0 : i32
    return %arg0, %c0_i32 : i32, i32
  }
  func.func @transform_3(%arg0: i32, %arg1: memref<1xi32, #tpu.memory_space<smem>>) -> (i32, i32) {
    %c0_i32 = arith.constant 0 : i32
    %c0_i32_0 = arith.constant 0 : i32
    %c0_i32_1 = arith.constant 0 : i32
    return %c0_i32, %c0_i32_0 : i32, i32
  }
  func.func @transform_4(%arg0: i32, %arg1: memref<1xi32, #tpu.memory_space<smem>>) -> (i32, i32) {
    %c0_i32 = arith.constant 0 : i32
    %c0_i32_0 = arith.constant 0 : i32
    %c0_i32_1 = arith.constant 0 : i32
    return %c0_i32, %c0_i32_0 : i32, i32
  }
  func.func @transform_5(%arg0: i32, %arg1: memref<1xi32, #tpu.memory_space<smem>>) -> (i32, i32) {
    %c0_i32 = arith.constant 0 : i32
    %c0_i32_0 = arith.constant 0 : i32
    return %arg0, %c0_i32 : i32, i32
  }
}

</mosaic_0001>

<llo_original>
// kernel: tpu_custom_call.1
$region0: #{tpu_custom_call.1}
  #allocation0 [shape = 'u32[]', space=smem, size = 0x4, offset = 0x4, fixed_abs, tag = 'smem constant byte address 0x4 - core index']
  #allocation1 [shape = 'u32[144,128]{1,0:T(1,128)}', space=vmem, size = 0x12000, scoped, tag = 'internal scratch']
  #allocation2 [shape = 's32[1]{0}', space=sflag, size = 0x4, scoped, tag = 'scoped memory for tpu_custom_call.1']
  #allocation3 [shape = 's32[1]{0:T(128)S(6)}', space=smem, size = 0x200, scoped, tag = 'prefetched SMEM operand 0']
  %s0 = inlined_call_operand.<no memory space> [shape: s32[1], index: 0, kind: input, shape index: {}]
  %s1 = inlined_call_operand.vmem [shape: s32[64,1], index: 1, kind: input, shape index: {}]
  %s2 = inlined_call_operand.vmem [shape: s32[64,1], index: 2, kind: input, shape index: {}]
  %s3 = inlined_call_operand.vmem [shape: s32[64,5], index: 3, kind: input, shape index: {}]
  %s4 = inlined_call_operand.vmem [shape: f32[64,32], index: 4, kind: input, shape index: {}]
  %s5 = inlined_call_operand.vmem [shape: f32[64,32], index: 5, kind: input, shape index: {}]
  %s6 = inlined_call_operand.hbm [shape: f32[8,128], index: 6, kind: output, shape index: {}]
  %s7 = sld [smem:[#allocation0]]
  $region30: #{tpu_custom_call.1} parent=0
    _
  %s9 = ssub.s32 1, %s7
  %s10 = scalar_select 0, %s9, %s7
  %11 = sst [smem:[#allocation3]] %s0
  $region1: #{tpu_custom_call.1} parent=0
    #allocation4 [shape = 'u8[4096]{0}', space=vmem, size = 0x1000, scoped, tag = 'output window, operand 0, single buffered']
    #allocation5 [shape = 's32[1]{0}', space=sflag, size = 0x4, scoped, tag = 'scoped memory for tpu_custom_call.1']
    %12 = vsyncpa [#allocation5], 0
    // Predicated region
    $region2: #{tpu_custom_call.1} parent=1 // pred_check
      _
    $region3: #{tpu_custom_call.1} parent=1 // pred_check_branch
      %14 = sbr.rel (0) target = $region5
    $region4: #{tpu_custom_call.1} parent=1 // pred_region
      _
    $region5: #{tpu_custom_call.1} parent=1 // pred_fallthru
      _
    // Predicated region
    $region6: #{tpu_custom_call.1} parent=1 // pred_check
      _
    $region7: #{tpu_custom_call.1} parent=1 // pred_check_branch
      %16 = sbr.rel (0) target = $region9
    $region8: #{tpu_custom_call.1} parent=1 // pred_region
      _
    $region9: #{tpu_custom_call.1} parent=1 // pred_fallthru
      _
    // Predicated region
    $region10: #{tpu_custom_call.1} parent=1 // pred_check
      _
    $region11: #{tpu_custom_call.1} parent=1 // pred_check_branch
      %18 = sbr.rel (0) target = $region13
    $region12: #{tpu_custom_call.1} parent=1 // pred_region
      _
    $region13: #{tpu_custom_call.1} parent=1 // pred_fallthru
      _
    // Predicated region
    $region14: #{tpu_custom_call.1} parent=1 // pred_check
      _
    $region15: #{tpu_custom_call.1} parent=1 // pred_check_branch
      %20 = sbr.rel (0) target = $region17
    $region16: #{tpu_custom_call.1} parent=1 // pred_region
      _
    $region17: #{tpu_custom_call.1} parent=1 // pred_fallthru
      _
    // Predicated region
    $region18: #{tpu_custom_call.1} parent=1 // pred_check
      _
    $region19: #{tpu_custom_call.1} parent=1 // pred_check_branch
      %22 = sbr.rel (0) target = $region21
    $region20: #{tpu_custom_call.1} parent=1 // pred_region
      _
    $region21: #{tpu_custom_call.1} parent=1 // pred_fallthru
      _
    %v23 = vlaneseq
    %v24 = vand.u32 %v23, 127
    %v25 = vld [vmem:[%s1] sm:$0xff]
    %v26 = vld [vmem:[%s1 + $0x8] sm:$0xff]
    %v27 = vld [vmem:[%s1 + $0x10] sm:$0xff]
    %v28 = vld [vmem:[%s1 + $0x18] sm:$0xff]
    %v29 = vld [vmem:[%s1 + $0x20] sm:$0xff]
    %v30 = vld [vmem:[%s1 + $0x28] sm:$0xff]
    %v31 = vld [vmem:[%s1 + $0x30] sm:$0xff]
    %v32 = vld [vmem:[%s1 + $0x38] sm:$0xff]
    %33 = vset.pattern.permute.xlu0 0
    %34 = vperm.xlu0 %33, %v25
    %v35 = vpop.permute.xlu0 %34
    %36 = vset.pattern.permute.xlu0 0
    %37 = vperm.xlu0 %36, %v26
    %v38 = vpop.permute.xlu0 %37
    %39 = vset.pattern.permute.xlu0 0
    %40 = vperm.xlu0 %39, %v27
    %v41 = vpop.permute.xlu0 %40
    %42 = vset.pattern.permute.xlu0 0
    %43 = vperm.xlu0 %42, %v28
    %v44 = vpop.permute.xlu0 %43
    %45 = vset.pattern.permute.xlu0 0
    %46 = vperm.xlu0 %45, %v29
    %v47 = vpop.permute.xlu0 %46
    %48 = vset.pattern.permute.xlu0 0
    %49 = vperm.xlu0 %48, %v30
    %v50 = vpop.permute.xlu0 %49
    %51 = vset.pattern.permute.xlu0 0
    %52 = vperm.xlu0 %51, %v31
    %v53 = vpop.permute.xlu0 %52
    %54 = vset.pattern.permute.xlu0 0
    %55 = vperm.xlu0 %54, %v32
    %v56 = vpop.permute.xlu0 %55
    %vm57 = vcmp.eq.s32.totalorder %v35, %v24
    %vm58 = vcmp.eq.s32.totalorder %v38, %v24
    %vm59 = vcmp.eq.s32.totalorder %v41, %v24
    %vm60 = vcmp.eq.s32.totalorder %v44, %v24
    %vm61 = vcmp.eq.s32.totalorder %v47, %v24
    %vm62 = vcmp.eq.s32.totalorder %v50, %v24
    %vm63 = vcmp.eq.s32.totalorder %v53, %v24
    %vm64 = vcmp.eq.s32.totalorder %v56, %v24
    %v65 = vsel %vm57, 1, 0
    %v66 = vsel %vm58, 1, 0
    %v67 = vsel %vm59, 1, 0
    %v68 = vsel %vm60, 1, 0
    %v69 = vsel %vm61, 1, 0
    %v70 = vsel %vm62, 1, 0
    %v71 = vsel %vm63, 1, 0
    %v72 = vsel %vm64, 1, 0
    %v73 = vcvt.s32.f32 %v65
    %v74 = vcvt.s32.f32 %v66
    %v75 = vcvt.s32.f32 %v67
    %v76 = vcvt.s32.f32 %v68
    %v77 = vcvt.s32.f32 %v69
    %v78 = vcvt.s32.f32 %v70
    %v79 = vcvt.s32.f32 %v71
    %v80 = vcvt.s32.f32 %v72
    %v81 = vld [vmem:[%s2] sm:$0xff]
    %v82 = vld [vmem:[%s2 + $0x8] sm:$0xff]
    %v83 = vld [vmem:[%s2 + $0x10] sm:$0xff]
    %v84 = vld [vmem:[%s2 + $0x18] sm:$0xff]
    %v85 = vld [vmem:[%s2 + $0x20] sm:$0xff]
    %v86 = vld [vmem:[%s2 + $0x28] sm:$0xff]
    %v87 = vld [vmem:[%s2 + $0x30] sm:$0xff]
    %v88 = vld [vmem:[%s2 + $0x38] sm:$0xff]
    %89 = vset.pattern.permute.xlu0 0
    %90 = vperm.xlu0 %89, %v81
    %v91 = vpop.permute.xlu0 %90
    %92 = vset.pattern.permute.xlu0 0
    %93 = vperm.xlu0 %92, %v82
    %v94 = vpop.permute.xlu0 %93
    %95 = vset.pattern.permute.xlu0 0
    %96 = vperm.xlu0 %95, %v83
    %v97 = vpop.permute.xlu0 %96
    %98 = vset.pattern.permute.xlu0 0
    %99 = vperm.xlu0 %98, %v84
    %v100 = vpop.permute.xlu0 %99
    %101 = vset.pattern.permute.xlu0 0
    %102 = vperm.xlu0 %101, %v85
    %v103 = vpop.permute.xlu0 %102
    %104 = vset.pattern.permute.xlu0 0
    %105 = vperm.xlu0 %104, %v86
    %v106 = vpop.permute.xlu0 %105
    %107 = vset.pattern.permute.xlu0 0
    %108 = vperm.xlu0 %107, %v87
    %v109 = vpop.permute.xlu0 %108
    %110 = vset.pattern.permute.xlu0 0
    %111 = vperm.xlu0 %110, %v88
    %v112 = vpop.permute.xlu0 %111
    %vm113 = vcmp.eq.s32.totalorder %v91, %v24
    %vm114 = vcmp.eq.s32.totalorder %v94, %v24
    %vm115 = vcmp.eq.s32.totalorder %v97, %v24
    %vm116 = vcmp.eq.s32.totalorder %v100, %v24
    %vm117 = vcmp.eq.s32.totalorder %v103, %v24
    %vm118 = vcmp.eq.s32.totalorder %v106, %v24
    %vm119 = vcmp.eq.s32.totalorder %v109, %v24
    %vm120 = vcmp.eq.s32.totalorder %v112, %v24
    %v121 = vsel %vm113, 1, 0
    %v122 = vsel %vm114, 1, 0
    %v123 = vsel %vm115, 1, 0
    %v124 = vsel %vm116, 1, 0
    %v125 = vsel %vm117, 1, 0
    %v126 = vsel %vm118, 1, 0
    %v127 = vsel %vm119, 1, 0
    %v128 = vsel %vm120, 1, 0
    %v129 = vcvt.s32.f32 %v121
    %v130 = vcvt.s32.f32 %v122
    %v131 = vcvt.s32.f32 %v123
    %v132 = vcvt.s32.f32 %v124
    %v133 = vcvt.s32.f32 %v125
    %v134 = vcvt.s32.f32 %v126
    %v135 = vcvt.s32.f32 %v127
    %v136 = vcvt.s32.f32 %v128
    %v137 = vld [vmem:[%s3] sm:$0xff]
    %v138 = vld [vmem:[%s3 + $0x8] sm:$0xff]
    %v139 = vld [vmem:[%s3 + $0x10] sm:$0xff]
    %v140 = vld [vmem:[%s3 + $0x18] sm:$0xff]
    %v141 = vld [vmem:[%s3 + $0x20] sm:$0xff]
    %v142 = vld [vmem:[%s3 + $0x28] sm:$0xff]
    %v143 = vld [vmem:[%s3 + $0x30] sm:$0xff]
    %v144 = vld [vmem:[%s3 + $0x38] sm:$0xff]
    %145 = vset.pattern.permute.xlu0 0
    %146 = vperm.xlu0 %145, %v137
    %v147 = vpop.permute.xlu0 %146
    %148 = vset.pattern.permute.xlu0 0
    %149 = vperm.xlu0 %148, %v138
    %v150 = vpop.permute.xlu0 %149
    %151 = vset.pattern.permute.xlu0 0
    %152 = vperm.xlu0 %151, %v139
    %v153 = vpop.permute.xlu0 %152
    %154 = vset.pattern.permute.xlu0 0
    %155 = vperm.xlu0 %154, %v140
    %v156 = vpop.permute.xlu0 %155
    %157 = vset.pattern.permute.xlu0 0
    %158 = vperm.xlu0 %157, %v141
    %v159 = vpop.permute.xlu0 %158
    %160 = vset.pattern.permute.xlu0 0
    %161 = vperm.xlu0 %160, %v142
    %v162 = vpop.permute.xlu0 %161
    %163 = vset.pattern.permute.xlu0 0
    %164 = vperm.xlu0 %163, %v143
    %v165 = vpop.permute.xlu0 %164
    %166 = vset.pattern.permute.xlu0 0
    %167 = vperm.xlu0 %166, %v144
    %v168 = vpop.permute.xlu0 %167
    %vm169 = vcmp.eq.s32.totalorder %v147, %v24
    %vm170 = vcmp.eq.s32.totalorder %v150, %v24
    %vm171 = vcmp.eq.s32.totalorder %v153, %v24
    %vm172 = vcmp.eq.s32.totalorder %v156, %v24
    %vm173 = vcmp.eq.s32.totalorder %v159, %v24
    %vm174 = vcmp.eq.s32.totalorder %v162, %v24
    %vm175 = vcmp.eq.s32.totalorder %v165, %v24
    %vm176 = vcmp.eq.s32.totalorder %v168, %v24
    %v177 = vsel %vm169, 1, 0
    %v178 = vsel %vm170, 1, 0
    %v179 = vsel %vm171, 1, 0
    %v180 = vsel %vm172, 1, 0
    %v181 = vsel %vm173, 1, 0
    %v182 = vsel %vm174, 1, 0
    %v183 = vsel %vm175, 1, 0
    %v184 = vsel %vm176, 1, 0
    %v185 = vcvt.s32.f32 %v177
    %v186 = vcvt.s32.f32 %v178
    %v187 = vcvt.s32.f32 %v179
    %v188 = vcvt.s32.f32 %v180
    %v189 = vcvt.s32.f32 %v181
    %v190 = vcvt.s32.f32 %v182
    %v191 = vcvt.s32.f32 %v183
    %v192 = vcvt.s32.f32 %v184
    %v193 = vadd.f32 %v185, 0.0
    %v194 = vadd.f32 %v186, 0.0
    %v195 = vadd.f32 %v187, 0.0
    %v196 = vadd.f32 %v188, 0.0
    %v197 = vadd.f32 %v189, 0.0
    %v198 = vadd.f32 %v190, 0.0
    %v199 = vadd.f32 %v191, 0.0
    %v200 = vadd.f32 %v192, 0.0
    %201 = vset.pattern.permute.xlu0 1
    %202 = vperm.xlu0 %201, %v137
    %v203 = vpop.permute.xlu0 %202
    %204 = vset.pattern.permute.xlu0 1
    %205 = vperm.xlu0 %204, %v138
    %v206 = vpop.permute.xlu0 %205
    %207 = vset.pattern.permute.xlu0 1
    %208 = vperm.xlu0 %207, %v139
    %v209 = vpop.permute.xlu0 %208
    %210 = vset.pattern.permute.xlu0 1
    %211 = vperm.xlu0 %210, %v140
    %v212 = vpop.permute.xlu0 %211
    %213 = vset.pattern.permute.xlu0 1
    %214 = vperm.xlu0 %213, %v141
    %v215 = vpop.permute.xlu0 %214
    %216 = vset.pattern.permute.xlu0 1
    %217 = vperm.xlu0 %216, %v142
    %v218 = vpop.permute.xlu0 %217
    %219 = vset.pattern.permute.xlu0 1
    %220 = vperm.xlu0 %219, %v143
    %v221 = vpop.permute.xlu0 %220
    %222 = vset.pattern.permute.xlu0 1
    %223 = vperm.xlu0 %222, %v144
    %v224 = vpop.permute.xlu0 %223
    %vm225 = vcmp.eq.s32.totalorder %v203, %v24
    %vm226 = vcmp.eq.s32.totalorder %v206, %v24
    %vm227 = vcmp.eq.s32.totalorder %v209, %v24
    %vm228 = vcmp.eq.s32.totalorder %v212, %v24
    %vm229 = vcmp.eq.s32.totalorder %v215, %v24
    %vm230 = vcmp.eq.s32.totalorder %v218, %v24
    %vm231 = vcmp.eq.s32.totalorder %v221, %v24
    %vm232 = vcmp.eq.s32.totalorder %v224, %v24
    %v233 = vsel %vm225, 1, 0
    %v234 = vsel %vm226, 1, 0
    %v235 = vsel %vm227, 1, 0
    %v236 = vsel %vm228, 1, 0
    %v237 = vsel %vm229, 1, 0
    %v238 = vsel %vm230, 1, 0
    %v239 = vsel %vm231, 1, 0
    %v240 = vsel %vm232, 1, 0
    %v241 = vcvt.s32.f32 %v233
    %v242 = vcvt.s32.f32 %v234
    %v243 = vcvt.s32.f32 %v235
    %v244 = vcvt.s32.f32 %v236
    %v245 = vcvt.s32.f32 %v237
    %v246 = vcvt.s32.f32 %v238
    %v247 = vcvt.s32.f32 %v239
    %v248 = vcvt.s32.f32 %v240
    %v249 = vadd.f32 %v193, %v241
    %v250 = vadd.f32 %v194, %v242
    %v251 = vadd.f32 %v195, %v243
    %v252 = vadd.f32 %v196, %v244
    %v253 = vadd.f32 %v197, %v245
    %v254 = vadd.f32 %v198, %v246
    %v255 = vadd.f32 %v199, %v247
    %v256 = vadd.f32 %v200, %v248
    %257 = vset.pattern.permute.xlu0 2
    %258 = vperm.xlu0 %257, %v137
    %v259 = vpop.permute.xlu0 %258
    %260 = vset.pattern.permute.xlu0 2
    %261 = vperm.xlu0 %260, %v138
    %v262 = vpop.permute.xlu0 %261
    %263 = vset.pattern.permute.xlu0 2
    %264 = vperm.xlu0 %263, %v139
    %v265 = vpop.permute.xlu0 %264
    %266 = vset.pattern.permute.xlu0 2
    %267 = vperm.xlu0 %266, %v140
    %v268 = vpop.permute.xlu0 %267
    %269 = vset.pattern.permute.xlu0 2
    %270 = vperm.xlu0 %269, %v141
    %v271 = vpop.permute.xlu0 %270
    %272 = vset.pattern.permute.xlu0 2
    %273 = vperm.xlu0 %272, %v142
    %v274 = vpop.permute.xlu0 %273
    %275 = vset.pattern.permute.xlu0 2
    %276 = vperm.xlu0 %275, %v143
    %v277 = vpop.permute.xlu0 %276
    %278 = vset.pattern.permute.xlu0 2
    %279 = vperm.xlu0 %278, %v144
    %v280 = vpop.permute.xlu0 %279
    %vm281 = vcmp.eq.s32.totalorder %v259, %v24
    %vm282 = vcmp.eq.s32.totalorder %v262, %v24
    %vm283 = vcmp.eq.s32.totalorder %v265, %v24
    %vm284 = vcmp.eq.s32.totalorder %v268, %v24
    %vm285 = vcmp.eq.s32.totalorder %v271, %v24
    %vm286 = vcmp.eq.s32.totalorder %v274, %v24
    %vm287 = vcmp.eq.s32.totalorder %v277, %v24
    %vm288 = vcmp.eq.s32.totalorder %v280, %v24
    %v289 = vsel %vm281, 1, 0
    %v290 = vsel %vm282, 1, 0
    %v291 = vsel %vm283, 1, 0
    %v292 = vsel %vm284, 1, 0
    %v293 = vsel %vm285, 1, 0
    %v294 = vsel %vm286, 1, 0
    %v295 = vsel %vm287, 1, 0
    %v296 = vsel %vm288, 1, 0
    %v297 = vcvt.s32.f32 %v289
    %v298 = vcvt.s32.f32 %v290
    %v299 = vcvt.s32.f32 %v291
    %v300 = vcvt.s32.f32 %v292
    %v301 = vcvt.s32.f32 %v293
    %v302 = vcvt.s32.f32 %v294
    %v303 = vcvt.s32.f32 %v295
    %v304 = vcvt.s32.f32 %v296
    %v305 = vadd.f32 %v249, %v297
    %v306 = vadd.f32 %v250, %v298
    %v307 = vadd.f32 %v251, %v299
    %v308 = vadd.f32 %v252, %v300
    %v309 = vadd.f32 %v253, %v301
    %v310 = vadd.f32 %v254, %v302
    %v311 = vadd.f32 %v255, %v303
    %v312 = vadd.f32 %v256, %v304
    %313 = vset.pattern.permute.xlu0 3
    %314 = vperm.xlu0 %313, %v137
    %v315 = vpop.permute.xlu0 %314
    %316 = vset.pattern.permute.xlu0 3
    %317 = vperm.xlu0 %316, %v138
    %v318 = vpop.permute.xlu0 %317
    %319 = vset.pattern.permute.xlu0 3
    %320 = vperm.xlu0 %319, %v139
    %v321 = vpop.permute.xlu0 %320
    %322 = vset.pattern.permute.xlu0 3
    %323 = vperm.xlu0 %322, %v140
    %v324 = vpop.permute.xlu0 %323
    %325 = vset.pattern.permute.xlu0 3
    %326 = vperm.xlu0 %325, %v141
    %v327 = vpop.permute.xlu0 %326
    %328 = vset.pattern.permute.xlu0 3
    %329 = vperm.xlu0 %328, %v142
    %v330 = vpop.permute.xlu0 %329
    %331 = vset.pattern.permute.xlu0 3
    %332 = vperm.xlu0 %331, %v143
    %v333 = vpop.permute.xlu0 %332
    %334 = vset.pattern.permute.xlu0 3
    %335 = vperm.xlu0 %334, %v144
    %v336 = vpop.permute.xlu0 %335
    %vm337 = vcmp.eq.s32.totalorder %v315, %v24
    %vm338 = vcmp.eq.s32.totalorder %v318, %v24
    %vm339 = vcmp.eq.s32.totalorder %v321, %v24
    %vm340 = vcmp.eq.s32.totalorder %v324, %v24
    %vm341 = vcmp.eq.s32.totalorder %v327, %v24
    %vm342 = vcmp.eq.s32.totalorder %v330, %v24
    %vm343 = vcmp.eq.s32.totalorder %v333, %v24
    %vm344 = vcmp.eq.s32.totalorder %v336, %v24
    %v345 = vsel %vm337, 1, 0
    %v346 = vsel %vm338, 1, 0
    %v347 = vsel %vm339, 1, 0
    %v348 = vsel %vm340, 1, 0
    %v349 = vsel %vm341, 1, 0
    %v350 = vsel %vm342, 1, 0
    %v351 = vsel %vm343, 1, 0
    %v352 = vsel %vm344, 1, 0
    %v353 = vcvt.s32.f32 %v345
    %v354 = vcvt.s32.f32 %v346
    %v355 = vcvt.s32.f32 %v347
    %v356 = vcvt.s32.f32 %v348
    %v357 = vcvt.s32.f32 %v349
    %v358 = vcvt.s32.f32 %v350
    %v359 = vcvt.s32.f32 %v351
    %v360 = vcvt.s32.f32 %v352
    %v361 = vadd.f32 %v305, %v353
    %v362 = vadd.f32 %v306, %v354
    %v363 = vadd.f32 %v307, %v355
    %v364 = vadd.f32 %v308, %v356
    %v365 = vadd.f32 %v309, %v357
    %v366 = vadd.f32 %v310, %v358
    %v367 = vadd.f32 %v311, %v359
    %v368 = vadd.f32 %v312, %v360
    %369 = vset.pattern.permute.xlu0 4
    %370 = vperm.xlu0 %369, %v137
    %v371 = vpop.permute.xlu0 %370
    %372 = vset.pattern.permute.xlu0 4
    %373 = vperm.xlu0 %372, %v138
    %v374 = vpop.permute.xlu0 %373
    %375 = vset.pattern.permute.xlu0 4
    %376 = vperm.xlu0 %375, %v139
    %v377 = vpop.permute.xlu0 %376
    %378 = vset.pattern.permute.xlu0 4
    %379 = vperm.xlu0 %378, %v140
    %v380 = vpop.permute.xlu0 %379
    %381 = vset.pattern.permute.xlu0 4
    %382 = vperm.xlu0 %381, %v141
    %v383 = vpop.permute.xlu0 %382
    %384 = vset.pattern.permute.xlu0 4
    %385 = vperm.xlu0 %384, %v142
    %v386 = vpop.permute.xlu0 %385
    %387 = vset.pattern.permute.xlu0 4
    %388 = vperm.xlu0 %387, %v143
    %v389 = vpop.permute.xlu0 %388
    %390 = vset.pattern.permute.xlu0 4
    %391 = vperm.xlu0 %390, %v144
    %v392 = vpop.permute.xlu0 %391
    %vm393 = vcmp.eq.s32.totalorder %v371, %v24
    %vm394 = vcmp.eq.s32.totalorder %v374, %v24
    %vm395 = vcmp.eq.s32.totalorder %v377, %v24
    %vm396 = vcmp.eq.s32.totalorder %v380, %v24
    %vm397 = vcmp.eq.s32.totalorder %v383, %v24
    %vm398 = vcmp.eq.s32.totalorder %v386, %v24
    %vm399 = vcmp.eq.s32.totalorder %v389, %v24
    %vm400 = vcmp.eq.s32.totalorder %v392, %v24
    %v401 = vsel %vm393, 1, 0
    %v402 = vsel %vm394, 1, 0
    %v403 = vsel %vm395, 1, 0
    %v404 = vsel %vm396, 1, 0
    %v405 = vsel %vm397, 1, 0
    %v406 = vsel %vm398, 1, 0
    %v407 = vsel %vm399, 1, 0
    %v408 = vsel %vm400, 1, 0
    %v409 = vcvt.s32.f32 %v401
    %v410 = vcvt.s32.f32 %v402
    %v411 = vcvt.s32.f32 %v403
    %v412 = vcvt.s32.f32 %v404
    %v413 = vcvt.s32.f32 %v405
    %v414 = vcvt.s32.f32 %v406
    %v415 = vcvt.s32.f32 %v407
    %v416 = vcvt.s32.f32 %v408
    %v417 = vadd.f32 %v361, %v409
    %v418 = vadd.f32 %v362, %v410
    %v419 = vadd.f32 %v363, %v411
    %v420 = vadd.f32 %v364, %v412
    %v421 = vadd.f32 %v365, %v413
    %v422 = vadd.f32 %v366, %v414
    %v423 = vadd.f32 %v367, %v415
    %v424 = vadd.f32 %v368, %v416
    %v425 = vld [vmem:[%s4] sm:$0xff]
    %v426 = vld [vmem:[%s4 + $0x8] sm:$0xff]
    %v427 = vld [vmem:[%s4 + $0x10] sm:$0xff]
    %v428 = vld [vmem:[%s4 + $0x18] sm:$0xff]
    %v429 = vld [vmem:[%s4 + $0x20] sm:$0xff]
    %v430 = vld [vmem:[%s4 + $0x28] sm:$0xff]
    %v431 = vld [vmem:[%s4 + $0x30] sm:$0xff]
    %v432 = vld [vmem:[%s4 + $0x38] sm:$0xff]
    %v433 = vld [vmem:[%s5] sm:$0xff]
    %v434 = vld [vmem:[%s5 + $0x8] sm:$0xff]
    %v435 = vld [vmem:[%s5 + $0x10] sm:$0xff]
    %v436 = vld [vmem:[%s5 + $0x18] sm:$0xff]
    %v437 = vld [vmem:[%s5 + $0x20] sm:$0xff]
    %v438 = vld [vmem:[%s5 + $0x28] sm:$0xff]
    %v439 = vld [vmem:[%s5 + $0x30] sm:$0xff]
    %v440 = vld [vmem:[%s5 + $0x38] sm:$0xff]
    %vm441 = vcmask 523264
    %v443 = vsel %vm441, %v73, 0
    %v446 = vsel %vm441, %v74, 0
    %v449 = vsel %vm441, %v75, 0
    %v452 = vsel %vm441, %v76, 0
    %v455 = vsel %vm441, %v77, 0
    %v458 = vsel %vm441, %v78, 0
    %v461 = vsel %vm441, %v79, 0
    %v464 = vsel %vm441, %v80, 0
    %466 = vmatprep.subr.mxu0 0.0
    %467 = vmatpush1.msra.mxu0 0.0
    %468 = vmatprep.subr.mxu0 0.0
    %469 = vmatpush1.msra.mxu0 0.0
    %470 = vmatprep.subr.mxu0 0.0
    %471 = vmatpush1.msra.mxu0 0.0
    %472 = vmatprep.subr.mxu0 0.0
    %473 = vmatpush1.msra.mxu0 0.0
    %474 = vmatprep.subr.mxu0 0.0
    %475 = vmatpush1.msra.mxu0 0.0
    %476 = vmatprep.subr.mxu0 0.0
    %477 = vmatpush1.msra.mxu0 0.0
    %478 = vmatprep.subr.mxu0 0.0
    %479 = vmatpush1.msra.mxu0 0.0
    %480 = vmatprep.subr.mxu0 0.0
    %481 = vmatpush1.msra.mxu0 0.0
    %482 = vmatprep.subr.mxu0 0.0
    %483 = vmatpush1.msra.mxu0 %v432
    %484 = vmatprep.subr.mxu0 0.0
    %485 = vmatpush1.msra.mxu0 %v431
    %486 = vmatprep.subr.mxu0 0.0
    %487 = vmatpush1.msra.mxu0 %v430
    %488 = vmatprep.subr.mxu0 0.0
    %489 = vmatpush1.msra.mxu0 %v429
    %490 = vmatprep.subr.mxu0 0.0
    %491 = vmatpush1.msra.mxu0 %v428
    %492 = vmatprep.subr.mxu0 0.0
    %493 = vmatpush1.msra.mxu0 %v427
    %494 = vmatprep.subr.mxu0 0.0
    %495 = vmatpush1.msra.mxu0 %v426
    %496 = vmatprep.subr.mxu0 0.0
    %497 = vmatpush1.msra.mxu0 %v425
    %498 = vmatprep.subr.mxu0 0.0
    %499 = vmatpush2.msra.mxu0 0.0
    %500 = vmatprep.subr.mxu0 0.0
    %501 = vmatpush2.msra.mxu0 0.0
    %502 = vmatprep.subr.mxu0 0.0
    %503 = vmatpush2.msra.mxu0 0.0
    %504 = vmatprep.subr.mxu0 0.0
    %505 = vmatpush2.msra.mxu0 0.0
    %506 = vmatprep.subr.mxu0 0.0
    %507 = vmatpush2.msra.mxu0 0.0
    %508 = vmatprep.subr.mxu0 0.0
    %509 = vmatpush2.msra.mxu0 0.0
    %510 = vmatprep.subr.mxu0 0.0
    %511 = vmatpush2.msra.mxu0 0.0
    %512 = vmatprep.subr.mxu0 0.0
    %513 = vmatpush2.msra.mxu0 0.0
    %514 = vmatprep.subr.mxu0 0.0
    %515 = vmatpush2.msra.mxu0 0.0
    %516 = vmatprep.subr.mxu0 0.0
    %517 = vmatpush2.msra.mxu0 0.0
    %518 = vmatprep.subr.mxu0 0.0
    %519 = vmatpush2.msra.mxu0 0.0
    %520 = vmatprep.subr.mxu0 0.0
    %521 = vmatpush2.msra.mxu0 0.0
    %522 = vmatprep.subr.mxu0 0.0
    %523 = vmatpush2.msra.mxu0 0.0
    %524 = vmatprep.subr.mxu0 0.0
    %525 = vmatpush2.msra.mxu0 0.0
    %526 = vmatprep.subr.mxu0 0.0
    %527 = vmatpush2.msra.mxu0 0.0
    %528 = vmatprep.subr.mxu0 0.0
    %529 = vmatpush2.msra.mxu0 0.0
    %530 = vmatprep.mubr.f32.mxu0 0.0
    %531 = vmatmul.mubr.f32.gmra.mxu0 %v443
    %v532 = vpop.f32.mrf.mxu0
    %v533 = vadd.f32 0.0, %v532
    %v534 = vpop.f32.mrf.mxu0
    %535 = vmatprep.mubr.f32.mxu0 0.0
    %536 = vmatmul.mubr.f32.gmra.mxu0 %v446
    %v537 = vpop.f32.mrf.mxu0
    %v538 = vadd.f32 0.0, %v537
    %v539 = vpop.f32.mrf.mxu0
    %540 = vmatprep.mubr.f32.mxu0 0.0
    %541 = vmatmul.mubr.f32.gmra.mxu0 %v449
    %v542 = vpop.f32.mrf.mxu0
    %v543 = vadd.f32 0.0, %v542
    %v544 = vpop.f32.mrf.mxu0
    %545 = vmatprep.mubr.f32.mxu0 0.0
    %546 = vmatmul.mubr.f32.gmra.mxu0 %v452
    %v547 = vpop.f32.mrf.mxu0
    %v548 = vadd.f32 0.0, %v547
    %v549 = vpop.f32.mrf.mxu0
    %550 = vmatprep.mubr.f32.mxu0 0.0
    %551 = vmatmul.mubr.f32.gmra.mxu0 %v455
    %v552 = vpop.f32.mrf.mxu0
    %v553 = vadd.f32 0.0, %v552
    %v554 = vpop.f32.mrf.mxu0
    %555 = vmatprep.mubr.f32.mxu0 0.0
    %556 = vmatmul.mubr.f32.gmra.mxu0 %v458
    %v557 = vpop.f32.mrf.mxu0
    %v558 = vadd.f32 0.0, %v557
    %v559 = vpop.f32.mrf.mxu0
    %560 = vmatprep.mubr.f32.mxu0 0.0
    %561 = vmatmul.mubr.f32.gmra.mxu0 %v461
    %v562 = vpop.f32.mrf.mxu0
    %v563 = vadd.f32 0.0, %v562
    %v564 = vpop.f32.mrf.mxu0
    %565 = vmatprep.mubr.f32.mxu0 0.0
    %566 = vmatmul.mubr.f32.gmra.mxu0 %v464
    %v567 = vpop.f32.mrf.mxu0
    %v568 = vadd.f32 0.0, %v567
    %v569 = vpop.f32.mrf.mxu0
    %570 = vdwg.mxu0
    %v572 = vsel %vm441, %v129, 0
    %v575 = vsel %vm441, %v130, 0
    %v578 = vsel %vm441, %v131, 0
    %v581 = vsel %vm441, %v132, 0
    %v584 = vsel %vm441, %v133, 0
    %v587 = vsel %vm441, %v134, 0
    %v590 = vsel %vm441, %v135, 0
    %v593 = vsel %vm441, %v136, 0
    %v596 = vsel %vm441, %v417, 0
    %v599 = vsel %vm441, %v418, 0
    %v602 = vsel %vm441, %v419, 0
    %v605 = vsel %vm441, %v420, 0
    %v608 = vsel %vm441, %v421, 0
    %v611 = vsel %vm441, %v422, 0
    %v614 = vsel %vm441, %v423, 0
    %v617 = vsel %vm441, %v424, 0
    %619 = vmatprep.subr.mxu0 0.0
    %620 = vmatpush1.msra.mxu0 0.0
    %621 = vmatprep.subr.mxu0 0.0
    %622 = vmatpush1.msra.mxu0 0.0
    %623 = vmatprep.subr.mxu0 0.0
    %624 = vmatpush1.msra.mxu0 0.0
    %625 = vmatprep.subr.mxu0 0.0
    %626 = vmatpush1.msra.mxu0 0.0
    %627 = vmatprep.subr.mxu0 0.0
    %628 = vmatpush1.msra.mxu0 0.0
    %629 = vmatprep.subr.mxu0 0.0
    %630 = vmatpush1.msra.mxu0 0.0
    %631 = vmatprep.subr.mxu0 0.0
    %632 = vmatpush1.msra.mxu0 0.0
    %633 = vmatprep.subr.mxu0 0.0
    %634 = vmatpush1.msra.mxu0 0.0
    %635 = vmatprep.subr.mxu0 0.0
    %636 = vmatpush1.msra.mxu0 %v440
    %637 = vmatprep.subr.mxu0 0.0
    %638 = vmatpush1.msra.mxu0 %v439
    %639 = vmatprep.subr.mxu0 0.0
    %640 = vmatpush1.msra.mxu0 %v438
    %641 = vmatprep.subr.mxu0 0.0
    %642 = vmatpush1.msra.mxu0 %v437
    %643 = vmatprep.subr.mxu0 0.0
    %644 = vmatpush1.msra.mxu0 %v436
    %645 = vmatprep.subr.mxu0 0.0
    %646 = vmatpush1.msra.mxu0 %v435
    %647 = vmatprep.subr.mxu0 0.0
    %648 = vmatpush1.msra.mxu0 %v434
    %649 = vmatprep.subr.mxu0 0.0
    %650 = vmatpush1.msra.mxu0 %v433
    %651 = vmatprep.subr.mxu0 0.0
    %652 = vmatpush2.msra.mxu0 0.0
    %653 = vmatprep.subr.mxu0 0.0
    %654 = vmatpush2.msra.mxu0 0.0
    %655 = vmatprep.subr.mxu0 0.0
    %656 = vmatpush2.msra.mxu0 0.0
    %657 = vmatprep.subr.mxu0 0.0
    %658 = vmatpush2.msra.mxu0 0.0
    %659 = vmatprep.subr.mxu0 0.0
    %660 = vmatpush2.msra.mxu0 0.0
    %661 = vmatprep.subr.mxu0 0.0
    %662 = vmatpush2.msra.mxu0 0.0
    %663 = vmatprep.subr.mxu0 0.0
    %664 = vmatpush2.msra.mxu0 0.0
    %665 = vmatprep.subr.mxu0 0.0
    %666 = vmatpush2.msra.mxu0 0.0
    %667 = vmatprep.subr.mxu0 0.0
    %668 = vmatpush2.msra.mxu0 0.0
    %669 = vmatprep.subr.mxu0 0.0
    %670 = vmatpush2.msra.mxu0 0.0
    %671 = vmatprep.subr.mxu0 0.0
    %672 = vmatpush2.msra.mxu0 0.0
    %673 = vmatprep.subr.mxu0 0.0
    %674 = vmatpush2.msra.mxu0 0.0
    %675 = vmatprep.subr.mxu0 0.0
    %676 = vmatpush2.msra.mxu0 0.0
    %677 = vmatprep.subr.mxu0 0.0
    %678 = vmatpush2.msra.mxu0 0.0
    %679 = vmatprep.subr.mxu0 0.0
    %680 = vmatpush2.msra.mxu0 0.0
    %681 = vmatprep.subr.mxu0 0.0
    %682 = vmatpush2.msra.mxu0 0.0
    %683 = vmatprep.mubr.f32.mxu0 0.0
    %684 = vmatmul.mubr.f32.gmra.mxu0 %v572
    %v685 = vpop.f32.mrf.mxu0
    %v686 = vadd.f32 0.0, %v685
    %v687 = vpop.f32.mrf.mxu0
    %688 = vmatprep.mubr.f32.mxu0 0.0
    %689 = vmatmul.mubr.f32.gmra.mxu0 %v575
    %v690 = vpop.f32.mrf.mxu0
    %v691 = vadd.f32 0.0, %v690
    %v692 = vpop.f32.mrf.mxu0
    %693 = vmatprep.mubr.f32.mxu0 0.0
    %694 = vmatmul.mubr.f32.gmra.mxu0 %v578
    %v695 = vpop.f32.mrf.mxu0
    %v696 = vadd.f32 0.0, %v695
    %v697 = vpop.f32.mrf.mxu0
    %698 = vmatprep.mubr.f32.mxu0 0.0
    %699 = vmatmul.mubr.f32.gmra.mxu0 %v581
    %v700 = vpop.f32.mrf.mxu0
    %v701 = vadd.f32 0.0, %v700
    %v702 = vpop.f32.mrf.mxu0
    %703 = vmatprep.mubr.f32.mxu0 0.0
    %704 = vmatmul.mubr.f32.gmra.mxu0 %v584
    %v705 = vpop.f32.mrf.mxu0
    %v706 = vadd.f32 0.0, %v705
    %v707 = vpop.f32.mrf.mxu0
    %708 = vmatprep.mubr.f32.mxu0 0.0
    %709 = vmatmul.mubr.f32.gmra.mxu0 %v587
    %v710 = vpop.f32.mrf.mxu0
    %v711 = vadd.f32 0.0, %v710
    %v712 = vpop.f32.mrf.mxu0
    %713 = vmatprep.mubr.f32.mxu0 0.0
    %714 = vmatmul.mubr.f32.gmra.mxu0 %v590
    %v715 = vpop.f32.mrf.mxu0
    %v716 = vadd.f32 0.0, %v715
    %v717 = vpop.f32.mrf.mxu0
    %718 = vmatprep.mubr.f32.mxu0 0.0
    %719 = vmatmul.mubr.f32.gmra.mxu0 %v593
    %v720 = vpop.f32.mrf.mxu0
    %v721 = vadd.f32 0.0, %v720
    %v722 = vpop.f32.mrf.mxu0
    %723 = vmatprep.mubr.f32.mxu0 0.0
    %724 = vmatmul.mubr.f32.gmra.mxu0 %v596
    %v725 = vpop.f32.mrf.mxu0
    %v726 = vadd.f32 0.0, %v725
    %v727 = vpop.f32.mrf.mxu0
    %728 = vmatprep.mubr.f32.mxu0 0.0
    %729 = vmatmul.mubr.f32.gmra.mxu0 %v599
    %v730 = vpop.f32.mrf.mxu0
    %v731 = vadd.f32 0.0, %v730
    %v732 = vpop.f32.mrf.mxu0
    %733 = vmatprep.mubr.f32.mxu0 0.0
    %734 = vmatmul.mubr.f32.gmra.mxu0 %v602
    %v735 = vpop.f32.mrf.mxu0
    %v736 = vadd.f32 0.0, %v735
    %v737 = vpop.f32.mrf.mxu0
    %738 = vmatprep.mubr.f32.mxu0 0.0
    %739 = vmatmul.mubr.f32.gmra.mxu0 %v605
    %v740 = vpop.f32.mrf.mxu0
    %v741 = vadd.f32 0.0, %v740
    %v742 = vpop.f32.mrf.mxu0
    %743 = vmatprep.mubr.f32.mxu0 0.0
    %744 = vmatmul.mubr.f32.gmra.mxu0 %v608
    %v745 = vpop.f32.mrf.mxu0
    %v746 = vadd.f32 0.0, %v745
    %v747 = vpop.f32.mrf.mxu0
    %748 = vmatprep.mubr.f32.mxu0 0.0
    %749 = vmatmul.mubr.f32.gmra.mxu0 %v611
    %v750 = vpop.f32.mrf.mxu0
    %v751 = vadd.f32 0.0, %v750
    %v752 = vpop.f32.mrf.mxu0
    %753 = vmatprep.mubr.f32.mxu0 0.0
    %754 = vmatmul.mubr.f32.gmra.mxu0 %v614
    %v755 = vpop.f32.mrf.mxu0
    %v756 = vadd.f32 0.0, %v755
    %v757 = vpop.f32.mrf.mxu0
    %758 = vmatprep.mubr.f32.mxu0 0.0
    %759 = vmatmul.mubr.f32.gmra.mxu0 %v617
    %v760 = vpop.f32.mrf.mxu0
    %v761 = vadd.f32 0.0, %v760
    %v762 = vpop.f32.mrf.mxu0
    %763 = vdwg.mxu0
    %v764 = vmul.f32 %v533, %v686
    %v765 = vmul.f32 %v538, %v691
    %v766 = vmul.f32 %v543, %v696
    %v767 = vmul.f32 %v548, %v701
    %v768 = vmul.f32 %v553, %v706
    %v769 = vmul.f32 %v558, %v711
    %v770 = vmul.f32 %v563, %v716
    %v771 = vmul.f32 %v568, %v721
    %vm772 = vcmask 261120
    %v773 = vsel %vm772, %v764, 0.0
    %774 = vadd.xlane.f32.xlu0 %v773
    %v775 = vpop.xlane.xlu0 %774
    %v776 = vsel %vm772, %v765, 0.0
    %777 = vadd.xlane.f32.xlu0 %v776
    %v778 = vpop.xlane.xlu0 %777
    %v779 = vsel %vm772, %v766, 0.0
    %780 = vadd.xlane.f32.xlu0 %v779
    %v781 = vpop.xlane.xlu0 %780
    %v782 = vsel %vm772, %v767, 0.0
    %783 = vadd.xlane.f32.xlu0 %v782
    %v784 = vpop.xlane.xlu0 %783
    %v785 = vsel %vm772, %v768, 0.0
    %786 = vadd.xlane.f32.xlu0 %v785
    %v787 = vpop.xlane.xlu0 %786
    %v788 = vsel %vm772, %v769, 0.0
    %789 = vadd.xlane.f32.xlu0 %v788
    %v790 = vpop.xlane.xlu0 %789
    %v791 = vsel %vm772, %v770, 0.0
    %792 = vadd.xlane.f32.xlu0 %v791
    %v793 = vpop.xlane.xlu0 %792
    %v794 = vsel %vm772, %v771, 0.0
    %795 = vadd.xlane.f32.xlu0 %v794
    %v796 = vpop.xlane.xlu0 %795
    %v797 = vmul.f32 %v533, %v726
    %v798 = vmul.f32 %v538, %v731
    %v799 = vmul.f32 %v543, %v736
    %v800 = vmul.f32 %v548, %v741
    %v801 = vmul.f32 %v553, %v746
    %v802 = vmul.f32 %v558, %v751
    %v803 = vmul.f32 %v563, %v756
    %v804 = vmul.f32 %v568, %v761
    %v805 = vsel %vm772, %v797, 0.0
    %806 = vadd.xlane.f32.xlu0 %v805
    %v807 = vpop.xlane.xlu0 %806
    %v808 = vsel %vm772, %v798, 0.0
    %809 = vadd.xlane.f32.xlu0 %v808
    %v810 = vpop.xlane.xlu0 %809
    %v811 = vsel %vm772, %v799, 0.0
    %812 = vadd.xlane.f32.xlu0 %v811
    %v813 = vpop.xlane.xlu0 %812
    %v814 = vsel %vm772, %v800, 0.0
    %815 = vadd.xlane.f32.xlu0 %v814
    %v816 = vpop.xlane.xlu0 %815
    %v817 = vsel %vm772, %v801, 0.0
    %818 = vadd.xlane.f32.xlu0 %v817
    %v819 = vpop.xlane.xlu0 %818
    %v820 = vsel %vm772, %v802, 0.0
    %821 = vadd.xlane.f32.xlu0 %v820
    %v822 = vpop.xlane.xlu0 %821
    %v823 = vsel %vm772, %v803, 0.0
    %824 = vadd.xlane.f32.xlu0 %v823
    %v825 = vpop.xlane.xlu0 %824
    %v826 = vsel %vm772, %v804, 0.0
    %827 = vadd.xlane.f32.xlu0 %v826
    %v828 = vpop.xlane.xlu0 %827
    %s829 = smul.u32 0, 64
    %v830 = vlaneseq
    %v831 = vshrl.u32 %v830, 7
    %v832 = vadd.s32 %v831, 8
    %v833 = vadd.s32 %v831, 16
    %v834 = vadd.s32 %v831, 24
    %v835 = vadd.s32 %v831, 32
    %v836 = vadd.s32 %v831, 40
    %v837 = vadd.s32 %v831, 48
    %v838 = vadd.s32 %v831, 56
    %v839 = vstv %s829
    %v840 = vadd.s32 %v839, %v831
    %v841 = vadd.s32 %v839, %v832
    %v842 = vadd.s32 %v839, %v833
    %v843 = vadd.s32 %v839, %v834
    %v844 = vadd.s32 %v839, %v835
    %v845 = vadd.s32 %v839, %v836
    %v846 = vadd.s32 %v839, %v837
    %v847 = vadd.s32 %v839, %v838
    %s848 = sld [smem:[#allocation3]]
    %v849 = vstv %s848
    %vm850 = vcmp.lt.s32.totalorder %v840, %v849
    %vm851 = vcmp.lt.s32.totalorder %v841, %v849
    %vm852 = vcmp.lt.s32.totalorder %v842, %v849
    %vm853 = vcmp.lt.s32.totalorder %v843, %v849
    %vm854 = vcmp.lt.s32.totalorder %v844, %v849
    %vm855 = vcmp.lt.s32.totalorder %v845, %v849
    %vm856 = vcmp.lt.s32.totalorder %v846, %v849
    %vm857 = vcmp.lt.s32.totalorder %v847, %v849
    %v858 = vsel %vm850, 1, 0
    %v859 = vsel %vm851, 1, 0
    %v860 = vsel %vm852, 1, 0
    %v861 = vsel %vm853, 1, 0
    %v862 = vsel %vm854, 1, 0
    %v863 = vsel %vm855, 1, 0
    %v864 = vsel %vm856, 1, 0
    %v865 = vsel %vm857, 1, 0
    %v866 = vcvt.s32.f32 %v858
    %v867 = vcvt.s32.f32 %v859
    %v868 = vcvt.s32.f32 %v860
    %v869 = vcvt.s32.f32 %v861
    %v870 = vcvt.s32.f32 %v862
    %v871 = vcvt.s32.f32 %v863
    %v872 = vcvt.s32.f32 %v864
    %v873 = vcvt.s32.f32 %v865
    %v874 = vmin.f32 %v775, 0.0
    %v875 = vmin.f32 %v778, 0.0
    %v876 = vmin.f32 %v781, 0.0
    %v877 = vmin.f32 %v784, 0.0
    %v878 = vmin.f32 %v787, 0.0
    %v879 = vmin.f32 %v790, 0.0
    %v880 = vmin.f32 %v793, 0.0
    %v881 = vmin.f32 %v796, 0.0
    %v882 = vand.u32 2147483647, %v775
    %v883 = vand.u32 2147483647, %v778
    %v884 = vand.u32 2147483647, %v781
    %v885 = vand.u32 2147483647, %v784
    %v886 = vand.u32 2147483647, %v787
    %v887 = vand.u32 2147483647, %v790
    %v888 = vand.u32 2147483647, %v793
    %v889 = vand.u32 2147483647, %v796
    %v890 = vsub.f32 0.0, %v882
    %v891 = vsub.f32 0.0, %v883
    %v892 = vsub.f32 0.0, %v884
    %v893 = vsub.f32 0.0, %v885
    %v894 = vsub.f32 0.0, %v886
    %v895 = vsub.f32 0.0, %v887
    %v896 = vsub.f32 0.0, %v888
    %v897 = vsub.f32 0.0, %v889
    %v898 = vmul.f32 %v890, 1.442695
    %v899 = vpow.pop %v898
    %v900 = vmul.f32 %v891, 1.442695
    %v901 = vpow.pop %v900
    %v902 = vmul.f32 %v892, 1.442695
    %v903 = vpow.pop %v902
    %v904 = vmul.f32 %v893, 1.442695
    %v905 = vpow.pop %v904
    %v906 = vmul.f32 %v894, 1.442695
    %v907 = vpow.pop %v906
    %v908 = vmul.f32 %v895, 1.442695
    %v909 = vpow.pop %v908
    %v910 = vmul.f32 %v896, 1.442695
    %v911 = vpow.pop %v910
    %v912 = vmul.f32 %v897, 1.442695
    %v913 = vpow.pop %v912
    %v914 = vadd.f32 %v899, 1.0
    %v915 = vlog2.pop %v914
    %v916 = vmul.f32 %v915, 0.6931472
    %v917 = vmul.f32 -0.5, %v899
    %v918 = vadd.f32 %v917, 1.0
    %v919 = vmul.f32 %v918, %v899
    %v920 = vand.u32 2147483647, %v899
    %vm921 = vcmp.lt.f32.partialorder %v920, 0.0004427343
    %v922 = vsel %vm921, %v919, %v916
    %v923 = vadd.f32 %v901, 1.0
    %v924 = vlog2.pop %v923
    %v925 = vmul.f32 %v924, 0.6931472
    %v926 = vmul.f32 -0.5, %v901
    %v927 = vadd.f32 %v926, 1.0
    %v928 = vmul.f32 %v927, %v901
    %v929 = vand.u32 2147483647, %v901
    %vm930 = vcmp.lt.f32.partialorder %v929, 0.0004427343
    %v931 = vsel %vm930, %v928, %v925
    %v932 = vadd.f32 %v903, 1.0
    %v933 = vlog2.pop %v932
    %v934 = vmul.f32 %v933, 0.6931472
    %v935 = vmul.f32 -0.5, %v903
    %v936 = vadd.f32 %v935, 1.0
    %v937 = vmul.f32 %v936, %v903
    %v938 = vand.u32 2147483647, %v903
    %vm939 = vcmp.lt.f32.partialorder %v938, 0.0004427343
    %v940 = vsel %vm939, %v937, %v934
    %v941 = vadd.f32 %v905, 1.0
    %v942 = vlog2.pop %v941
    %v943 = vmul.f32 %v942, 0.6931472
    %v944 = vmul.f32 -0.5, %v905
    %v945 = vadd.f32 %v944, 1.0
    %v946 = vmul.f32 %v945, %v905
    %v947 = vand.u32 2147483647, %v905
    %vm948 = vcmp.lt.f32.partialorder %v947, 0.0004427343
    %v949 = vsel %vm948, %v946, %v943
    %v950 = vadd.f32 %v907, 1.0
    %v951 = vlog2.pop %v950
    %v952 = vmul.f32 %v951, 0.6931472
    %v953 = vmul.f32 -0.5, %v907
    %v954 = vadd.f32 %v953, 1.0
    %v955 = vmul.f32 %v954, %v907
    %v956 = vand.u32 2147483647, %v907
    %vm957 = vcmp.lt.f32.partialorder %v956, 0.0004427343
    %v958 = vsel %vm957, %v955, %v952
    %v959 = vadd.f32 %v909, 1.0
    %v960 = vlog2.pop %v959
    %v961 = vmul.f32 %v960, 0.6931472
    %v962 = vmul.f32 -0.5, %v909
    %v963 = vadd.f32 %v962, 1.0
    %v964 = vmul.f32 %v963, %v909
    %v965 = vand.u32 2147483647, %v909
    %vm966 = vcmp.lt.f32.partialorder %v965, 0.0004427343
    %v967 = vsel %vm966, %v964, %v961
    %v968 = vadd.f32 %v911, 1.0
    %v969 = vlog2.pop %v968
    %v970 = vmul.f32 %v969, 0.6931472
    %v971 = vmul.f32 -0.5, %v911
    %v972 = vadd.f32 %v971, 1.0
    %v973 = vmul.f32 %v972, %v911
    %v974 = vand.u32 2147483647, %v911
    %vm975 = vcmp.lt.f32.partialorder %v974, 0.0004427343
    %v976 = vsel %vm975, %v973, %v970
    %v977 = vadd.f32 %v913, 1.0
    %v978 = vlog2.pop %v977
    %v979 = vmul.f32 %v978, 0.6931472
    %v980 = vmul.f32 -0.5, %v913
    %v981 = vadd.f32 %v980, 1.0
    %v982 = vmul.f32 %v981, %v913
    %v983 = vand.u32 2147483647, %v913
    %vm984 = vcmp.lt.f32.partialorder %v983, 0.0004427343
    %v985 = vsel %vm984, %v982, %v979
    %v986 = vsub.f32 %v874, %v922
    %v987 = vsub.f32 %v875, %v931
    %v988 = vsub.f32 %v876, %v940
    %v989 = vsub.f32 %v877, %v949
    %v990 = vsub.f32 %v878, %v958
    %v991 = vsub.f32 %v879, %v967
    %v992 = vsub.f32 %v880, %v976
    %v993 = vsub.f32 %v881, %v985
    %v994 = vsub.f32 0.0, %v807
    %v995 = vsub.f32 0.0, %v810
    %v996 = vsub.f32 0.0, %v813
    %v997 = vsub.f32 0.0, %v816
    %v998 = vsub.f32 0.0, %v819
    %v999 = vsub.f32 0.0, %v822
    %v1000 = vsub.f32 0.0, %v825
    %v1001 = vsub.f32 0.0, %v828
    %v1002 = vmin.f32 %v994, 0.0
    %v1003 = vmin.f32 %v995, 0.0
    %v1004 = vmin.f32 %v996, 0.0
    %v1005 = vmin.f32 %v997, 0.0
    %v1006 = vmin.f32 %v998, 0.0
    %v1007 = vmin.f32 %v999, 0.0
    %v1008 = vmin.f32 %v1000, 0.0
    %v1009 = vmin.f32 %v1001, 0.0
    %v1010 = vand.u32 2147483647, %v994
    %v1011 = vand.u32 2147483647, %v995
    %v1012 = vand.u32 2147483647, %v996
    %v1013 = vand.u32 2147483647, %v997
    %v1014 = vand.u32 2147483647, %v998
    %v1015 = vand.u32 2147483647, %v999
    %v1016 = vand.u32 2147483647, %v1000
    %v1017 = vand.u32 2147483647, %v1001
    %v1018 = vsub.f32 0.0, %v1010
    %v1019 = vsub.f32 0.0, %v1011
    %v1020 = vsub.f32 0.0, %v1012
    %v1021 = vsub.f32 0.0, %v1013
    %v1022 = vsub.f32 0.0, %v1014
    %v1023 = vsub.f32 0.0, %v1015
    %v1024 = vsub.f32 0.0, %v1016
    %v1025 = vsub.f32 0.0, %v1017
    %v1026 = vmul.f32 %v1018, 1.442695
    %v1027 = vpow.pop %v1026
    %v1028 = vmul.f32 %v1019, 1.442695
    %v1029 = vpow.pop %v1028
    %v1030 = vmul.f32 %v1020, 1.442695
    %v1031 = vpow.pop %v1030
    %v1032 = vmul.f32 %v1021, 1.442695
    %v1033 = vpow.pop %v1032
    %v1034 = vmul.f32 %v1022, 1.442695
    %v1035 = vpow.pop %v1034
    %v1036 = vmul.f32 %v1023, 1.442695
    %v1037 = vpow.pop %v1036
    %v1038 = vmul.f32 %v1024, 1.442695
    %v1039 = vpow.pop %v1038
    %v1040 = vmul.f32 %v1025, 1.442695
    %v1041 = vpow.pop %v1040
    %v1042 = vadd.f32 %v1027, 1.0
    %v1043 = vlog2.pop %v1042
    %v1044 = vmul.f32 %v1043, 0.6931472
    %v1045 = vmul.f32 -0.5, %v1027
    %v1046 = vadd.f32 %v1045, 1.0
    %v1047 = vmul.f32 %v1046, %v1027
    %v1048 = vand.u32 2147483647, %v1027
    %vm1049 = vcmp.lt.f32.partialorder %v1048, 0.0004427343
    %v1050 = vsel %vm1049, %v1047, %v1044
    %v1051 = vadd.f32 %v1029, 1.0
    %v1052 = vlog2.pop %v1051
    %v1053 = vmul.f32 %v1052, 0.6931472
    %v1054 = vmul.f32 -0.5, %v1029
    %v1055 = vadd.f32 %v1054, 1.0
    %v1056 = vmul.f32 %v1055, %v1029
    %v1057 = vand.u32 2147483647, %v1029
    %vm1058 = vcmp.lt.f32.partialorder %v1057, 0.0004427343
    %v1059 = vsel %vm1058, %v1056, %v1053
    %v1060 = vadd.f32 %v1031, 1.0
    %v1061 = vlog2.pop %v1060
    %v1062 = vmul.f32 %v1061, 0.6931472
    %v1063 = vmul.f32 -0.5, %v1031
    %v1064 = vadd.f32 %v1063, 1.0
    %v1065 = vmul.f32 %v1064, %v1031
    %v1066 = vand.u32 2147483647, %v1031
    %vm1067 = vcmp.lt.f32.partialorder %v1066, 0.0004427343
    %v1068 = vsel %vm1067, %v1065, %v1062
    %v1069 = vadd.f32 %v1033, 1.0
    %v1070 = vlog2.pop %v1069
    %v1071 = vmul.f32 %v1070, 0.6931472
    %v1072 = vmul.f32 -0.5, %v1033
    %v1073 = vadd.f32 %v1072, 1.0
    %v1074 = vmul.f32 %v1073, %v1033
    %v1075 = vand.u32 2147483647, %v1033
    %vm1076 = vcmp.lt.f32.partialorder %v1075, 0.0004427343
    %v1077 = vsel %vm1076, %v1074, %v1071
    %v1078 = vadd.f32 %v1035, 1.0
    %v1079 = vlog2.pop %v1078
    %v1080 = vmul.f32 %v1079, 0.6931472
    %v1081 = vmul.f32 -0.5, %v1035
    %v1082 = vadd.f32 %v1081, 1.0
    %v1083 = vmul.f32 %v1082, %v1035
    %v1084 = vand.u32 2147483647, %v1035
    %vm1085 = vcmp.lt.f32.partialorder %v1084, 0.0004427343
    %v1086 = vsel %vm1085, %v1083, %v1080
    %v1087 = vadd.f32 %v1037, 1.0
    %v1088 = vlog2.pop %v1087
    %v1089 = vmul.f32 %v1088, 0.6931472
    %v1090 = vmul.f32 -0.5, %v1037
    %v1091 = vadd.f32 %v1090, 1.0
    %v1092 = vmul.f32 %v1091, %v1037
    %v1093 = vand.u32 2147483647, %v1037
    %vm1094 = vcmp.lt.f32.partialorder %v1093, 0.0004427343
    %v1095 = vsel %vm1094, %v1092, %v1089
    %v1096 = vadd.f32 %v1039, 1.0
    %v1097 = vlog2.pop %v1096
    %v1098 = vmul.f32 %v1097, 0.6931472
    %v1099 = vmul.f32 -0.5, %v1039
    %v1100 = vadd.f32 %v1099, 1.0
    %v1101 = vmul.f32 %v1100, %v1039
    %v1102 = vand.u32 2147483647, %v1039
    %vm1103 = vcmp.lt.f32.partialorder %v1102, 0.0004427343
    %v1104 = vsel %vm1103, %v1101, %v1098
    %v1105 = vadd.f32 %v1041, 1.0
    %v1106 = vlog2.pop %v1105
    %v1107 = vmul.f32 %v1106, 0.6931472
    %v1108 = vmul.f32 -0.5, %v1041
    %v1109 = vadd.f32 %v1108, 1.0
    %v1110 = vmul.f32 %v1109, %v1041
    %v1111 = vand.u32 2147483647, %v1041
    %vm1112 = vcmp.lt.f32.partialorder %v1111, 0.0004427343
    %v1113 = vsel %vm1112, %v1110, %v1107
    %v1114 = vsub.f32 %v1002, %v1050
    %v1115 = vsub.f32 %v1003, %v1059
    %v1116 = vsub.f32 %v1004, %v1068
    %v1117 = vsub.f32 %v1005, %v1077
    %v1118 = vsub.f32 %v1006, %v1086
    %v1119 = vsub.f32 %v1007, %v1095
    %v1120 = vsub.f32 %v1008, %v1104
    %v1121 = vsub.f32 %v1009, %v1113
    %v1122 = vadd.f32 %v986, %v1114
    %v1123 = vadd.f32 %v987, %v1115
    %v1124 = vadd.f32 %v988, %v1116
    %v1125 = vadd.f32 %v989, %v1117
    %v1126 = vadd.f32 %v990, %v1118
    %v1127 = vadd.f32 %v991, %v1119
    %v1128 = vadd.f32 %v992, %v1120
    %v1129 = vadd.f32 %v993, %v1121
    %v1130 = vmul.f32 %v1122, %v866
    %v1131 = vmul.f32 %v1123, %v867
    %v1132 = vmul.f32 %v1124, %v868
    %v1133 = vmul.f32 %v1125, %v869
    %v1134 = vmul.f32 %v1126, %v870
    %v1135 = vmul.f32 %v1127, %v871
    %v1136 = vmul.f32 %v1128, %v872
    %v1137 = vmul.f32 %v1129, %v873
    %vm1138 = vcmask 7168
    %v1139 = vsel %vm1138, %v1130, 0.0
    %v1140 = vsel %vm1138, %v1131, 0.0
    %v1141 = vadd.f32 %v1139, %v1140
    %v1142 = vsel %vm1138, %v1132, 0.0
    %v1143 = vadd.f32 %v1141, %v1142
    %v1144 = vsel %vm1138, %v1133, 0.0
    %v1145 = vadd.f32 %v1143, %v1144
    %v1146 = vsel %vm1138, %v1134, 0.0
    %v1147 = vadd.f32 %v1145, %v1146
    %v1148 = vsel %vm1138, %v1135, 0.0
    %v1149 = vadd.f32 %v1147, %v1148
    %v1150 = vsel %vm1138, %v1136, 0.0
    %v1151 = vadd.f32 %v1149, %v1150
    %v1152 = vsel %vm1138, %v1137, 0.0
    %v1153 = vadd.f32 %v1151, %v1152
    %1154 = vadd.xlane.f32.xlu0 %v1153
    %v1155 = vpop.xlane.xlu0 %1154
    %v1156 = vrot.slane %v1155, 4
    %v1157 = vadd.f32 %v1155, %v1156
    %v1158 = vrot.slane %v1157, 2
    %v1159 = vadd.f32 %v1157, %v1158
    %v1160 = vrot.slane %v1159, 1
    %v1161 = vadd.f32 %v1159, %v1160
    %s1162 = vtos %v1161
    %v1163 = vstv %s1162
    %1164 = vst [vmem:[#allocation4] sm:$0xff] %v1163
    // Predicated region
    $region22: #{tpu_custom_call.1} parent=1 // pred_check
      _
    $region23: #{tpu_custom_call.1} parent=1 // pred_check_branch
      %1166 = sbr.rel (0) target = $region25
    $region24: #{tpu_custom_call.1} parent=1 // pred_region
      %s1168 = ssub.s32 128, 128
      %1169 = vsyncadd [#allocation5], %s1168
      %s1171 = sshll.u32 [#allocation4], 4
      %s1172 = int_to_ptr.vmem [resolvable:$true] %s1171
      %1174 = dma.vmem_to_hbm [thread:$0]  %s1172, 128, %s6, [#allocation5]
    $region25: #{tpu_custom_call.1} parent=1 // pred_fallthru
      _
    // Predicated region
    $region26: #{tpu_custom_call.1} parent=1 // pred_check
      _
    $region27: #{tpu_custom_call.1} parent=1 // pred_check_branch
      %1176 = sbr.rel (0) target = $region29
    $region28: #{tpu_custom_call.1} parent=1 // pred_region
      %1177 = dma.done [#allocation5], 128
    $region29: #{tpu_custom_call.1} parent=1 // pred_fallthru
      _
    %1178 = vsyncpa [#allocation5], 1

</llo_original>
